<compile_context>
chip_gen: v5e
topology: v5e:2x2
jax: 0.10.0
libtpu: 0.0.40
codegen_flags: <defaults>
</compile_context>

<pallas_src>
import jax
import jax.numpy as jnp
from jax.experimental import pallas as pl
from jax.experimental.pallas import tpu as pltpu


def self_attention_kernel(x_ref, mask_ref, w1_ref, b1_ref, w2_ref, b2_ref, o_ref):
    # x_ref:    (TB, S, D)   block of TB batch rows
    # mask_ref: (TB, S)      lane-dense mask (S on lanes)
    # w1_ref:   (D, P)   b1_ref: (1, P)
    # w2_ref:   (1, P)   b2_ref: (1, 1)
    # o_ref:    (TB, D)      lane-dense output block
    TB, S, D = x_ref.shape
    P = w1_ref.shape[1]

    x = x_ref[...].astype(jnp.float32)                       # (TB, S, D)

    # Pre-pooling linear + tanh: one fused (TB*S, D) @ (D, P) MXU matmul.
    h = jnp.tanh(
        jnp.dot(x.reshape(TB * S, D), w1_ref[...],
                preferred_element_type=jnp.float32)
        + b1_ref[...]
    )                                                        # (TB*S, P)

    # Pooling linear (P -> 1): VPU multiply + lane reduce instead of an N=1 matmul.
    s = jnp.sum(h.reshape(TB, S, P) * w2_ref[...], axis=-1) + b2_ref[0, 0]  # (TB, S)

    # masked_fill(mask == 0, -1e9)
    s = jnp.where(mask_ref[...] == 0, jnp.float32(-1.0e9), s)

    # Lane-dense softmax over the sequence axis.
    smax = jnp.max(s, axis=-1, keepdims=True)                # (TB, 1)
    e = jnp.exp(s - smax)                                    # (TB, S)
    w = e * pl.reciprocal(jnp.sum(e, axis=-1, keepdims=True), approx=True)  # (TB, S)

    # Weighted sum over sequence: broadcast multiply + sublane reduce (no M=1 matmul).
    o = jnp.sum(x * w[:, :, None], axis=1)                   # (TB, D)
    o_ref[...] = o.astype(o_ref.dtype)


def _pick_batch_block(batch, max_tb=8):
    """Batch rows per grid step.

    Small batches run as a single grid step (per-step pipeline overhead
    dominates at tiny sizes); large batches use a sublane-aligned (multiple of
    8) block so the (TB, S)/(TB, D) blocks satisfy the (8, 128) tiling rule.
    """
    if batch <= max_tb:
        return batch
    for tb in range(max_tb - max_tb % 8, 7, -8):  # multiples of 8, descending
        if tb > 0 and batch % tb == 0:
            return tb
    return batch  # fall back: whole batch as one block


def self_attention(x, w1, b1, w2, b2, mask=None, *, max_batch_block=8):
    """x: (B, S, D), w1: (D, P), b1: (P,), w2: (P, 1), b2: (1,), mask: (B, S) or None."""
    B, S, D = x.shape
    P = w1.shape[1]
    if mask is None:
        mask = jnp.ones((B, S), dtype=jnp.float32)
    mask = mask.astype(jnp.float32)

    b1r = b1.reshape(1, P)
    w2r = w2.reshape(1, P)      # pooling weight as a lane-dense row vector
    b2r = b2.reshape(1, 1)

    tb = _pick_batch_block(B, max_batch_block)
    grid = (B // tb,)

    return pl.pallas_call(
        self_attention_kernel,
        out_shape=jax.ShapeDtypeStruct((B, D), x.dtype),
        grid_spec=pltpu.PrefetchScalarGridSpec(
            num_scalar_prefetch=0,
            grid=grid,
            in_specs=[
                pl.BlockSpec((tb, S, D), lambda b: (b, 0, 0)),  # x (TB batch rows)
                pl.BlockSpec((tb, S), lambda b: (b, 0)),        # mask (lane-dense)
                pl.BlockSpec((D, P), lambda b: (0, 0)),         # W1 (replicated)
                pl.BlockSpec((1, P), lambda b: (0, 0)),         # b1
                pl.BlockSpec((1, P), lambda b: (0, 0)),         # W2 row
                pl.BlockSpec((1, 1), lambda b: (0, 0)),         # b2
            ],
            out_specs=pl.BlockSpec((tb, D), lambda b: (b, 0)),  # lane-dense output
        ),
        compiler_params=pltpu.CompilerParams(
            dimension_semantics=("parallel",),
            vmem_limit_bytes=64 * 1024 * 1024,
        ),
    )(x, mask, w1, b1r, w2r, b2r)


def self_attention_ref(x, w1, b1, w2, b2, mask=None):
    h = jnp.tanh(x @ w1 + b1)                     # (B, S, P)
    s = (h @ w2)[..., 0] + b2[0]                  # (B, S)
    if mask is not None:
        s = jnp.where(mask == 0, -1.0e9, s)
    w = jax.nn.softmax(s, axis=-1)                # (B, S)
    return (x * w[..., None]).sum(axis=1)         # (B, D)


if __name__ == "__main__":
    B, S, D, P = 2, 8, 32, 16  # batch, seq, input_dim, pre_pooling_dim

    key = jax.random.PRNGKey(0)
    k_x, k_w1, k_b1, k_w2, k_b2, k_m = jax.random.split(key, 6)

    x = jax.random.normal(k_x, (B, S, D), dtype=jnp.float32)
    # deterministic parameter init (Linear layer shapes from the module's __init__)
    w1 = jax.random.normal(k_w1, (D, P), dtype=jnp.float32) * (1.0 / jnp.sqrt(D))
    b1 = jax.random.normal(k_b1, (P,), dtype=jnp.float32) * 0.1
    w2 = jax.random.normal(k_w2, (P, 1), dtype=jnp.float32) * (1.0 / jnp.sqrt(P))
    b2 = jax.random.normal(k_b2, (1,), dtype=jnp.float32) * 0.1
    # mask with a couple of zeroed positions to exercise the masked_fill path
    mask = (jax.random.uniform(k_m, (B, S)) > 0.2).astype(jnp.float32)
    mask = mask.at[:, 0].set(1.0)  # ensure at least one valid position per row

    out = self_attention(x, w1, b1, w2, b2, mask=mask)
    out = jax.block_until_ready(out)

    ref = self_attention_ref(x, w1, b1, w2, b2, mask=mask)
    assert out.shape == (B, D)
    # The kernel normalizes the softmax with the EUP approximate reciprocal, so
    # compare with a relative tolerance that comfortably covers that approximation.
    assert jnp.allclose(out, ref, rtol=2e-2, atol=1e-4), "mismatch vs reference"

    print("KERNEL_OK")
</pallas_src>

<mosaic_0001>
module attributes {stable_mosaic.version = 11 : i64} {
  func.func @self_attention_kernel(%arg0: i32, %arg1: memref<2x8x32xf32, #tpu.memory_space<vmem>>, %arg2: memref<2x8xf32, #tpu.memory_space<vmem>>, %arg3: memref<32x16xf32, #tpu.memory_space<vmem>>, %arg4: memref<1x16xf32, #tpu.memory_space<vmem>>, %arg5: memref<1x16xf32, #tpu.memory_space<vmem>>, %arg6: memref<1x1xf32, #tpu.memory_space<vmem>>, %arg7: memref<2x32xf32, #tpu.memory_space<vmem>>) attributes {dimension_semantics = [#tpu.dimension_semantics<parallel>], iteration_bounds = array<i64: 1>, scalar_prefetch = 0 : i64, scratch_operands = 0 : i64, tpu.core_type = #tpu.core_type<tc>, window_params = [{transform_indices = @transform_0, window_bounds = array<i64: 2, 8, 32>}, {transform_indices = @transform_1, window_bounds = array<i64: 2, 8>}, {pipeline_mode = #tpu.pipeline_mode<synchronous>, transform_indices = @transform_2, window_bounds = array<i64: 32, 16>}, {pipeline_mode = #tpu.pipeline_mode<synchronous>, transform_indices = @transform_3, window_bounds = array<i64: 1, 16>}, {pipeline_mode = #tpu.pipeline_mode<synchronous>, transform_indices = @transform_4, window_bounds = array<i64: 1, 16>}, {pipeline_mode = #tpu.pipeline_mode<synchronous>, transform_indices = @transform_5, window_bounds = array<i64: 1, 1>}, {transform_indices = @transform_6, window_bounds = array<i64: 2, 32>}]} {
    %c0 = arith.constant 0 : index
    %c0_0 = arith.constant 0 : index
    %c0_1 = arith.constant 0 : index
    %0 = vector.load %arg1[%c0, %c0_0, %c0_1] : memref<2x8x32xf32, #tpu.memory_space<vmem>>, vector<2x8x32xf32>
    %1 = vector.shape_cast %0 : vector<2x8x32xf32> to vector<16x32xf32>
    %c0_2 = arith.constant 0 : index
    %c0_3 = arith.constant 0 : index
    %2 = vector.load %arg3[%c0_2, %c0_3] : memref<32x16xf32, #tpu.memory_space<vmem>>, vector<32x16xf32>
    %cst = arith.constant dense<0.000000e+00> : vector<16x16xf32>
    %3 = tpu.matmul %1, %2, %cst {dimension_numbers = #tpu.dot_dimension_numbers<[1], [0], [0], [1], [0, 0, 1, 1], [], []>} : vector<16x32xf32>, vector<32x16xf32>, vector<16x16xf32> -> vector<16x16xf32>
    %c0_4 = arith.constant 0 : index
    %c0_5 = arith.constant 0 : index
    %4 = vector.load %arg4[%c0_4, %c0_5] : memref<1x16xf32, #tpu.memory_space<vmem>>, vector<1x16xf32>
    %5 = vector.broadcast %4 : vector<1x16xf32> to vector<16x16xf32>
    %6 = arith.addf %3, %5 : vector<16x16xf32>
    %7 = math.tanh %6 : vector<16x16xf32>
    %8 = vector.shape_cast %7 : vector<16x16xf32> to vector<2x8x16xf32>
    %c0_6 = arith.constant 0 : index
    %c0_7 = arith.constant 0 : index
    %9 = vector.load %arg5[%c0_6, %c0_7] : memref<1x16xf32, #tpu.memory_space<vmem>>, vector<1x16xf32>
    %10 = vector.shape_cast %9 : vector<1x16xf32> to vector<1x1x16xf32>
    %11 = vector.broadcast %10 : vector<1x1x16xf32> to vector<2x8x16xf32>
    %12 = arith.mulf %8, %11 : vector<2x8x16xf32>
    %cst_8 = arith.constant dense<0.000000e+00> : vector<2x8xf32>
    %13 = vector.multi_reduction <add>, %12, %cst_8 [2] : vector<2x8x16xf32> to vector<2x8xf32>
    %c0_9 = arith.constant 0 : index
    %c0_10 = arith.constant 0 : index
    %14 = vector.load %arg6[%c0_9, %c0_10] : memref<1x1xf32, #tpu.memory_space<vmem>>, vector<1x1xf32>
    %15 = vector.extract %14[0, 0] : f32 from vector<1x1xf32>
    %16 = vector.broadcast %15 : f32 to vector<2x8xf32>
    %17 = arith.addf %13, %16 : vector<2x8xf32>
    %c0_11 = arith.constant 0 : index
    %c0_12 = arith.constant 0 : index
    %18 = vector.load %arg2[%c0_11, %c0_12] : memref<2x8xf32, #tpu.memory_space<vmem>>, vector<2x8xf32>
    %cst_13 = arith.constant 0.000000e+00 : f32
    %19 = vector.broadcast %cst_13 : f32 to vector<2x8xf32>
    %20 = arith.cmpf oeq, %18, %19 : vector<2x8xf32>
    %cst_14 = arith.constant -1.000000e+09 : f32
    %21 = vector.broadcast %cst_14 : f32 to vector<2x8xf32>
    %22 = arith.select %20, %21, %17 : vector<2x8xi1>, vector<2x8xf32>
    %cst_15 = arith.constant dense<0xFF800000> : vector<2xf32>
    %23 = vector.multi_reduction <maximumf>, %22, %cst_15 [1] : vector<2x8xf32> to vector<2xf32>
    %24 = vector.shape_cast %23 : vector<2xf32> to vector<2x1xf32>
    %25 = vector.broadcast %24 : vector<2x1xf32> to vector<2x8xf32>
    %26 = arith.subf %22, %25 : vector<2x8xf32>
    %27 = math.exp %26 : vector<2x8xf32>
    %cst_16 = arith.constant dense<0.000000e+00> : vector<2xf32>
    %28 = vector.multi_reduction <add>, %27, %cst_16 [1] : vector<2x8xf32> to vector<2xf32>
    %29 = vector.shape_cast %28 : vector<2xf32> to vector<2x1xf32>
    %30 = tpu.reciprocal %29 {approx = true} : vector<2x1xf32> -> vector<2x1xf32>
    %31 = vector.broadcast %30 : vector<2x1xf32> to vector<2x8xf32>
    %32 = arith.mulf %27, %31 : vector<2x8xf32>
    %33 = vector.shape_cast %32 : vector<2x8xf32> to vector<2x8x1xf32>
    %34 = vector.broadcast %33 : vector<2x8x1xf32> to vector<2x8x32xf32>
    %35 = arith.mulf %0, %34 : vector<2x8x32xf32>
    %cst_17 = arith.constant dense<0.000000e+00> : vector<2x32xf32>
    %36 = vector.multi_reduction <add>, %35, %cst_17 [1] : vector<2x8x32xf32> to vector<2x32xf32>
    %c0_18 = arith.constant 0 : index
    %c0_19 = arith.constant 0 : index
    %37 = vector.load %arg7[%c0_18, %c0_19] : memref<2x32xf32, #tpu.memory_space<vmem>>, vector<2x32xf32>
    tpu.vector_store %arg7[%c0_18, %c0_19], %36 {strides = array<i32>} : memref<2x32xf32, #tpu.memory_space<vmem>>, vector<2x32xf32>,
    return
  }
  func.func @transform_0(%arg0: i32) -> (i32, i32, i32) {
    %c0_i32 = arith.constant 0 : i32
    %c0_i32_0 = arith.constant 0 : i32
    %c0_i32_1 = arith.constant 0 : i32
    return %arg0, %c0_i32, %c0_i32_0 : i32, i32, i32
  }
  func.func @transform_1(%arg0: i32) -> (i32, i32) {
    %c0_i32 = arith.constant 0 : i32
    %c0_i32_0 = arith.constant 0 : i32
    return %arg0, %c0_i32 : i32, i32
  }
  func.func @transform_2(%arg0: i32) -> (i32, i32) {
    %c0_i32 = arith.constant 0 : i32
    %c0_i32_0 = arith.constant 0 : i32
    %c0_i32_1 = arith.constant 0 : i32
    return %c0_i32, %c0_i32_0 : i32, i32
  }
  func.func @transform_3(%arg0: i32) -> (i32, i32) {
    %c0_i32 = arith.constant 0 : i32
    %c0_i32_0 = arith.constant 0 : i32
    %c0_i32_1 = arith.constant 0 : i32
    return %c0_i32, %c0_i32_0 : i32, i32
  }
  func.func @transform_4(%arg0: i32) -> (i32, i32) {
    %c0_i32 = arith.constant 0 : i32
    %c0_i32_0 = arith.constant 0 : i32
    %c0_i32_1 = arith.constant 0 : i32
    return %c0_i32, %c0_i32_0 : i32, i32
  }
  func.func @transform_5(%arg0: i32) -> (i32, i32) {
    %c0_i32 = arith.constant 0 : i32
    %c0_i32_0 = arith.constant 0 : i32
    %c0_i32_1 = arith.constant 0 : i32
    return %c0_i32, %c0_i32_0 : i32, i32
  }
  func.func @transform_6(%arg0: i32) -> (i32, i32) {
    %c0_i32 = arith.constant 0 : i32
    %c0_i32_0 = arith.constant 0 : i32
    return %arg0, %c0_i32 : i32, i32
  }
}

</mosaic_0001>

<llo_original>
// kernel: tpu_custom_call.1
$region0: #{tpu_custom_call.1}
  #allocation0 [shape = 'u32[]', space=smem, size = 0x4, offset = 0x4, fixed_abs, tag = 'smem constant byte address 0x4 - core index']
  #allocation1 [shape = 'u32[72,128]{1,0:T(1,128)}', space=vmem, size = 0x9000, scoped, tag = 'internal scratch']
  #allocation2 [shape = 'f32[1,1]{1,0:T(1,128)S(1)}', space=vmem, size = 0x200, scoped, tag = 'scoped memory for tpu_custom_call.1']
  %s0 = inlined_call_operand.vmem [shape: f32[2,8,32], index: 0, kind: input, shape index: {}]
  %s1 = inlined_call_operand.vmem [shape: f32[2,8], index: 1, kind: input, shape index: {}]
  %s2 = inlined_call_operand.vmem [shape: f32[32,16], index: 2, kind: input, shape index: {}]
  %s3 = inlined_call_operand.vmem [shape: f32[1,16], index: 3, kind: input, shape index: {}]
  %s4 = inlined_call_operand.vmem [shape: f32[1,16], index: 4, kind: input, shape index: {}]
  %s5 = inlined_call_operand.<no memory space> [shape: f32[1,1], index: 5, kind: input, shape index: {}]
  %s6 = inlined_call_operand.hbm [shape: f32[2,32], index: 6, kind: output, shape index: {}]
  %s7 = sld [smem:[#allocation0]]
  $region34: #{tpu_custom_call.1} parent=0
    _
  %s9 = ssub.s32 1, %s7
  %s10 = scalar_select 0, %s9, %s7
  %v11 = vstv %s5
  %12 = vst [vmem:[#allocation2] sm:$0x1] %v11
  $region1: #{tpu_custom_call.1} parent=0
    #allocation3 [shape = 'u8[1024]{0}', space=vmem, size = 0x400, scoped, tag = 'output window, operand 0, single buffered']
    #allocation4 [shape = 's32[1]{0}', space=sflag, size = 0x4, scoped, tag = 'scoped memory for tpu_custom_call.1']
    %13 = vsyncpa [#allocation4], 0
    // Predicated region
    $region2: #{tpu_custom_call.1} parent=1 // pred_check
      _
    $region3: #{tpu_custom_call.1} parent=1 // pred_check_branch
      %15 = sbr.rel (0) target = $region5
    $region4: #{tpu_custom_call.1} parent=1 // pred_region
      _
    $region5: #{tpu_custom_call.1} parent=1 // pred_fallthru
      _
    // Predicated region
    $region6: #{tpu_custom_call.1} parent=1 // pred_check
      _
    $region7: #{tpu_custom_call.1} parent=1 // pred_check_branch
      %17 = sbr.rel (0) target = $region9
    $region8: #{tpu_custom_call.1} parent=1 // pred_region
      _
    $region9: #{tpu_custom_call.1} parent=1 // pred_fallthru
      _
    // Predicated region
    $region10: #{tpu_custom_call.1} parent=1 // pred_check
      _
    $region11: #{tpu_custom_call.1} parent=1 // pred_check_branch
      %19 = sbr.rel (0) target = $region13
    $region12: #{tpu_custom_call.1} parent=1 // pred_region
      _
    $region13: #{tpu_custom_call.1} parent=1 // pred_fallthru
      _
    // Predicated region
    $region14: #{tpu_custom_call.1} parent=1 // pred_check
      _
    $region15: #{tpu_custom_call.1} parent=1 // pred_check_branch
      %21 = sbr.rel (0) target = $region17
    $region16: #{tpu_custom_call.1} parent=1 // pred_region
      _
    $region17: #{tpu_custom_call.1} parent=1 // pred_fallthru
      _
    // Predicated region
    $region18: #{tpu_custom_call.1} parent=1 // pred_check
      _
    $region19: #{tpu_custom_call.1} parent=1 // pred_check_branch
      %23 = sbr.rel (0) target = $region21
    $region20: #{tpu_custom_call.1} parent=1 // pred_region
      _
    $region21: #{tpu_custom_call.1} parent=1 // pred_fallthru
      _
    // Predicated region
    $region22: #{tpu_custom_call.1} parent=1 // pred_check
      _
    $region23: #{tpu_custom_call.1} parent=1 // pred_check_branch
      %25 = sbr.rel (0) target = $region25
    $region24: #{tpu_custom_call.1} parent=1 // pred_region
      _
    $region25: #{tpu_custom_call.1} parent=1 // pred_fallthru
      _
    %v26 = vld [vmem:[%s0] sm:$0xff]
    %v27 = vld [vmem:[%s0 + $0x8] sm:$0xff]
    %v28 = vld [vmem:[%s2] sm:$0xff]
    %v29 = vld [vmem:[%s2 + $0x8] sm:$0xff]
    %v30 = vld [vmem:[%s2 + $0x10] sm:$0xff]
    %v31 = vld [vmem:[%s2 + $0x18] sm:$0xff]
    %v32 = vld [vmem:[%s3] sm:$0x1]
    %v34 = vperm.slane %v32, 0
    %vm36 = vcmask 261120
    %v38 = vsel %vm36, %v26, 0
    %v41 = vsel %vm36, %v27, 0
    %43 = vmatpush.msra.mxu0 0.0
    %44 = vmatpush.msra.mxu0 0.0
    %45 = vmatpush.msra.mxu0 0.0
    %46 = vmatpush.msra.mxu0 0.0
    %47 = vmatpush.msra.mxu0 0.0
    %48 = vmatpush.msra.mxu0 0.0
    %49 = vmatpush.msra.mxu0 0.0
    %50 = vmatpush.msra.mxu0 0.0
    %51 = vmatpush.msra.mxu0 0.0
    %52 = vmatpush.msra.mxu0 0.0
    %53 = vmatpush.msra.mxu0 0.0
    %54 = vmatpush.msra.mxu0 0.0
    %55 = vmatpush.msra.mxu0 %v31
    %56 = vmatpush.msra.mxu0 %v30
    %57 = vmatpush.msra.mxu0 %v29
    %58 = vmatpush.msra.mxu0 %v28
    %59 = vmatmul.f32.gmra.mxu0 %v38
    %v60 = vpop.f32.mrf.mxu0
    %v61 = vadd.f32 %v34, %v60
    %62 = vmatmul.f32.gmra.mxu0 %v41
    %v63 = vpop.f32.mrf.mxu0
    %v64 = vadd.f32 %v34, %v63
    %65 = vdwg.mxu0
    %v66 = vtanh.pop %v61
    %v67 = vtanh.pop %v64
    %v68 = vld [vmem:[%s4] sm:$0x1]
    %v70 = vperm.slane %v68, 0
    %v72 = vmul.f32 %v66, %v70
    %v73 = vmul.f32 %v67, %v70
    %vm74 = vcmask 130048
    %v75 = vsel %vm74, %v72, 0.0
    %76 = vadd.xlane.f32.xlu0 %v75
    %v77 = vpop.xlane.xlu0 %76
    %v78 = vsel %vm74, %v73, 0.0
    %79 = vadd.xlane.f32.xlu0 %v78
    %v80 = vpop.xlane.xlu0 %79
    %v81 = vld [vmem:[#allocation2] sm:$0x1]
    %s82 = vtos %v81
    %v83 = vstv %s82
    %v84 = vadd.f32 %v77, %v83
    %v85 = vadd.f32 %v80, %v83
    %v86 = vld [vmem:[%s1] sm:$0x3]
    %vm87 = vcmp.eq.f32.partialorder %v86, 0.0
    %v90 = vlaneseq
    %v91 = vand.u32 %v90, 127
    %v92 = vperm.slane %v84, %v91
    %v93 = vperm.slane %v85, %v91
    %vm94 = vcmask 1041409
    %v95 = vsel %vm94, %v93, %v92
    %v97 = vsel %vm87, -1e+09, %v95
    %vm98 = vcmask 58368
    %v99 = vsel %vm98, %v97, -inf
    %100 = vmax.xlane.f32.xlu0 %v99
    %v101 = vpop.xlane.xlu0 %100
    %v102 = vsub.f32 %v97, %v101
    %v103 = vmul.f32 %v102, 1.442695
    %v104 = vpow.pop %v103
    %v105 = vsel %vm98, %v104, 0.0
    %106 = vadd.xlane.f32.xlu0 %v105
    %v107 = vpop.xlane.xlu0 %106
    %v108 = vrcp.pop %v107
    %v109 = vmul.f32 %v104, %v108
    %v110 = vperm.slane %v109, 0
    %v111 = vlaneseq
    %v112 = vshrl.u32 %v111, 7
    %114 = vset.pattern.permute.xlu0 %v112
    %115 = vperm.xlu0 %114, %v110
    %v116 = vpop.permute.xlu0 %115
    %v117 = vperm.slane %v109, 1
    %v118 = vlaneseq
    %v119 = vshrl.u32 %v118, 7
    %121 = vset.pattern.permute.xlu0 %v119
    %122 = vperm.xlu0 %121, %v117
    %v123 = vpop.permute.xlu0 %122
    %v124 = vmul.f32 %v26, %v116
    %v125 = vmul.f32 %v27, %v123
    %v126 = vsel %vm36, %v124, 0.0
    %v127 = vrot.slane %v126, 4
    %v128 = vadd.f32 %v126, %v127
    %v129 = vrot.slane %v128, 2
    %v130 = vadd.f32 %v128, %v129
    %v131 = vrot.slane %v130, 1
    %v132 = vadd.f32 %v130, %v131
    %v133 = vsel %vm36, %v125, 0.0
    %v134 = vrot.slane %v133, 4
    %v135 = vadd.f32 %v133, %v134
    %v136 = vrot.slane %v135, 2
    %v137 = vadd.f32 %v135, %v136
    %v138 = vrot.slane %v137, 1
    %v139 = vadd.f32 %v137, %v138
    %v142 = vsel %vm94, %v139, %v132
    %vm144 = vcmask 254976
    %145 = vst.msk [vmem:[#allocation3] sm:$0x3] %vm144, %v142
    // Predicated region
    $region26: #{tpu_custom_call.1} parent=1 // pred_check
      _
    $region27: #{tpu_custom_call.1} parent=1 // pred_check_branch
      %147 = sbr.rel (0) target = $region29
    $region28: #{tpu_custom_call.1} parent=1 // pred_region
      %149 = vsyncadd [#allocation4], 0
      %s151 = sshll.u32 [#allocation3], 4
      %s152 = int_to_ptr.vmem [resolvable:$true] %s151
      %s153 = sshll.u32 %s6, 4
      %s154 = int_to_ptr.hbm [resolvable:$true] %s153
      %156 = dma.vmem_to_hbm [thread:$0]  %s152, 32, %s154, [#allocation4]
    $region29: #{tpu_custom_call.1} parent=1 // pred_fallthru
      _
    // Predicated region
    $region30: #{tpu_custom_call.1} parent=1 // pred_check
      _
    $region31: #{tpu_custom_call.1} parent=1 // pred_check_branch
      %158 = sbr.rel (0) target = $region33
    $region32: #{tpu_custom_call.1} parent=1 // pred_region
      %160 = dma.done [#allocation4], 32
    $region33: #{tpu_custom_call.1} parent=1 // pred_fallthru
      _
    %161 = vsyncpa [#allocation4], 1

</llo_original>
